<compile_context>
chip_gen: v6e
topology: v6e:2x2x1
jax: 0.10.0
libtpu: 0.0.40
codegen_flags: <defaults>
</compile_context>

<pallas_src>
import jax
import jax.numpy as jnp
from jax.experimental import pallas as pl
from jax.experimental.pallas import tpu as pltpu


def _round_up(x: int, m: int) -> int:
    return ((x + m - 1) // m) * m


def _vmem_cap_bytes() -> int:
    # Leave headroom for compiler scratch / semaphores: ~78% of physical VMEM
    # (~50 MiB on v7x's 64 MiB, ~100 MiB on v5e/v6e's 128 MiB).
    try:
        return int(0.78 * pltpu.get_tpu_info().vmem_capacity_bytes)
    except Exception:
        return 48 * 1024 * 1024  # safe on every generation


def _conv_bias_lrelu_kernel(p_ref, w_ref, b_ref, o_ref, acc_ref):
    # p_ref:   (tm, tk)   bf16 im2col patch tile
    # w_ref:   (tk, tn)   bf16 flattened conv weight tile (transposed, lane-padded)
    # b_ref:   (1,  tn)   f32 bias tile (lane-padded)
    # o_ref:   (tm, tn)   bf16 output tile
    # acc_ref: (tm, tn)   f32 VMEM accumulator (persists across the K grid axis)
    k = pl.program_id(2)

    @pl.when(k == 0)
    def _():
        acc_ref[...] = jnp.zeros_like(acc_ref)

    acc_ref[...] += jnp.dot(p_ref[...], w_ref[...],
                            preferred_element_type=jnp.float32)

    @pl.when(k == pl.num_programs(2) - 1)
    def _():
        acc = acc_ref[...] + b_ref[...]
        # LeakyReLU(0.2): max(x, 0.2*x) == where(x>=0, x, 0.2*x) for slope in (0,1).
        o_ref[...] = jnp.maximum(acc, 0.2 * acc).astype(o_ref.dtype)


def encoder_block_forward(x, weight, bias, *, stride=2, padding=1, tm=512,
                          data_format_out="NCHW", out_dtype=jnp.bfloat16):
    """x: (N, C_in, H, W); weight: (O, C_in, KH, KW); bias: (O,).

    Returns LeakyReLU(Conv2d(x)) in `data_format_out` layout ("NCHW" matches the
    PyTorch module; "NHWC" skips the final relayout) with dtype `out_dtype`.
    """
    N, C, H, W = x.shape
    O, Ci, KH, KW = weight.shape
    assert Ci == C
    H_out = (H + 2 * padding - KH) // stride + 1
    W_out = (W + 2 * padding - KW) // stride + 1

    # ---- glue: im2col in plain JAX (bf16), no big patch transpose -------------
    # Convert x to NHWC once (small relayout); slicing + stack then already yields
    # (N, Ho, Wo, C, KH*KW), i.e. feature order (C, kh, kw) matching
    # weight.reshape(O, -1).
    xh = jnp.transpose(x, (0, 2, 3, 1)).astype(jnp.bfloat16)
    xp = jnp.pad(xh, ((0, 0), (padding, padding), (padding, padding), (0, 0)))
    cols = [
        xp[:, kh:kh + stride * H_out:stride, kw:kw + stride * W_out:stride, :]
        for kh in range(KH) for kw in range(KW)
    ]
    patches = jnp.stack(cols, axis=-1).reshape(N * H_out * W_out, C * KH * KW)

    M, Kdim = patches.shape

    # ---- tile-size selection ---------------------------------------------------
    # M tile: big (amortize per-step overhead, ~85% of HBM roofline at 512 on v6e).
    tm = min(tm, _round_up(M, 8))
    M_pad = _round_up(M, tm)

    # Output-channel tile: lane-dense (128-multiple), bounded so deep blocks fit
    # v7x's 64 MiB VMEM.
    O_pad = _round_up(O, 128)
    if O_pad <= 512:
        tn = O_pad
    else:
        tn = 256 if O_pad % 256 == 0 else 128

    # K tile: keep K resident while small; chunk in 512s (256-multiple for the
    # 2x256^2 MXU) with an f32 accumulator when it gets large.
    if Kdim <= 2048:
        tk, K_pad = Kdim, Kdim
    else:
        K_pad = _round_up(Kdim, 512)
        tk = 512

    if M_pad != M or K_pad != Kdim:
        patches = jnp.pad(patches, ((0, M_pad - M), (0, K_pad - Kdim)))

    w2 = weight.reshape(O, Kdim).T                                   # (K, O) f32
    w2 = jnp.pad(w2, ((0, K_pad - Kdim), (0, O_pad - O))).astype(jnp.bfloat16)
    b2 = jnp.pad(bias, (0, O_pad - O)).reshape(1, O_pad).astype(jnp.float32)

    grid = (M_pad // tm, O_pad // tn, K_pad // tk)

    # ---- VMEM budget: actual double-buffered footprint x1.5, generation-capped --
    footprint = (
        2 * tm * tk * 2        # patch tile (bf16), 2 buffers
        + 2 * tk * tn * 2      # weight tile (bf16), 2 buffers
        + 2 * 1 * tn * 4       # bias tile (f32), 2 buffers
        + 2 * tm * tn * 2      # output tile (bf16), 2 buffers
        + tm * tn * 4          # f32 accumulator scratch
    )
    vmem_limit = min(_vmem_cap_bytes(),
                     max(32 * 1024 * 1024, int(1.5 * footprint)))

    cost = pl.CostEstimate(
        flops=2 * M_pad * K_pad * O_pad,
        transcendentals=0,
        bytes_accessed=(M_pad * K_pad * 2 + K_pad * O_pad * 2
                        + O_pad * 4 + M_pad * O_pad * 2),
    )

    # ---- hot path: fused tiled GEMM + bias + LeakyReLU --------------------------
    out_flat = pl.pallas_call(
        _conv_bias_lrelu_kernel,
        out_shape=jax.ShapeDtypeStruct((M_pad, O_pad), jnp.bfloat16),
        grid_spec=pltpu.PrefetchScalarGridSpec(
            num_scalar_prefetch=0,
            grid=grid,
            in_specs=[
                pl.BlockSpec((tm, tk), lambda i, j, k: (i, k)),
                pl.BlockSpec((tk, tn), lambda i, j, k: (k, j)),
                pl.BlockSpec((1, tn), lambda i, j, k: (0, j)),
            ],
            out_specs=pl.BlockSpec((tm, tn), lambda i, j, k: (i, j)),
            scratch_shapes=[pltpu.VMEM((tm, tn), jnp.float32)],
        ),
        compiler_params=pltpu.CompilerParams(
            dimension_semantics=("parallel", "parallel", "arbitrary"),
            vmem_limit_bytes=vmem_limit,
        ),
        cost_estimate=cost,
    )(patches, w2, b2)

    out = out_flat[:M, :O].reshape(N, H_out, W_out, O)
    if data_format_out == "NCHW":
        # Module semantics; pass data_format_out="NHWC" to skip this relayout.
        out = jnp.transpose(out, (0, 3, 1, 2))
    return out.astype(out_dtype)


if __name__ == "__main__":
    # EncoderBlock(in_channels=4, out_channels=8)
    N, C_in, H, W = 2, 4, 16, 16
    C_out, K = 8, 4

    key = jax.random.PRNGKey(0)
    kx, kw, kb = jax.random.split(key, 3)
    x = jax.random.normal(kx, (N, C_in, H, W), dtype=jnp.float32)
    # deterministic synthetic parameters (PyTorch-like uniform init scale)
    fan_in = C_in * K * K
    bound = 1.0 / (fan_in ** 0.5)
    weight = jax.random.uniform(kw, (C_out, C_in, K, K), jnp.float32, -bound, bound)
    bias = jax.random.uniform(kb, (C_out,), jnp.float32, -bound, bound)

    out = encoder_block_forward(x, weight, bias)
    out = jax.block_until_ready(out)

    # Reference: plain JAX f32 conv + leaky relu. Tolerance covers bf16 GEMM
    # operands and bf16 output (accumulation is f32).
    ref = jax.lax.conv_general_dilated(
        x, weight, window_strides=(2, 2), padding=((1, 1), (1, 1)),
        dimension_numbers=("NCHW", "OIHW", "NCHW"),
    ) + bias.reshape(1, -1, 1, 1)
    ref = jnp.where(ref >= 0.0, ref, 0.2 * ref)

    assert out.shape == (N, C_out, H // 2, W // 2), out.shape
    err = float(jnp.max(jnp.abs(out.astype(jnp.float32) - ref)))
    assert jnp.allclose(out.astype(jnp.float32), ref, atol=5e-2, rtol=5e-2), err
    print("KERNEL_OK")
</pallas_src>

<mosaic_0001>
module attributes {stable_mosaic.version = 11 : i64} {
  func.func @_conv_bias_lrelu_kernel(%arg0: i32, %arg1: i32, %arg2: i32, %arg3: memref<128x64xbf16, #tpu.memory_space<vmem>>, %arg4: memref<64x128xbf16, #tpu.memory_space<vmem>>, %arg5: memref<1x128xf32, #tpu.memory_space<vmem>>, %arg6: memref<128x128xbf16, #tpu.memory_space<vmem>>, %arg7: memref<128x128xf32, #tpu.memory_space<vmem>>) attributes {dimension_semantics = [#tpu.dimension_semantics<parallel>, #tpu.dimension_semantics<parallel>, #tpu.dimension_semantics<arbitrary>], iteration_bounds = array<i64: 1, 1, 1>, scalar_prefetch = 0 : i64, scratch_operands = 1 : i64, tpu.core_type = #tpu.core_type<tc>, window_params = [{transform_indices = @transform_0, window_bounds = array<i64: 128, 64>}, {transform_indices = @transform_1, window_bounds = array<i64: 64, 128>}, {transform_indices = @transform_2, window_bounds = array<i64: 1, 128>}, {transform_indices = @transform_3, window_bounds = array<i64: 128, 128>}]} {
    %c0_i32 = arith.constant 0 : i32
    %0 = arith.cmpi eq, %arg2, %c0_i32 : i32
    %1 = arith.extui %0 : i1 to i32
    %c0_i32_0 = arith.constant 0 : i32
    %2 = arith.cmpi ne, %1, %c0_i32_0 : i32
    scf.if %2 {
      %cst_10 = arith.constant 0.000000e+00 : f32
      %12 = vector.broadcast %cst_10 : f32 to vector<128x128xf32>
      %c0_11 = arith.constant 0 : index
      %c0_12 = arith.constant 0 : index
      %13 = vector.load %arg7[%c0_11, %c0_12] : memref<128x128xf32, #tpu.memory_space<vmem>>, vector<128x128xf32>
      tpu.vector_store %arg7[%c0_11, %c0_12], %12 {strides = array<i32>} : memref<128x128xf32, #tpu.memory_space<vmem>>, vector<128x128xf32>,
    } else {
    }
    %c0 = arith.constant 0 : index
    %c0_1 = arith.constant 0 : index
    %3 = vector.load %arg7[%c0, %c0_1] : memref<128x128xf32, #tpu.memory_space<vmem>>, vector<128x128xf32>
    %c0_2 = arith.constant 0 : index
    %c0_3 = arith.constant 0 : index
    %4 = vector.load %arg3[%c0_2, %c0_3] : memref<128x64xbf16, #tpu.memory_space<vmem>>, vector<128x64xbf16>
    %c0_4 = arith.constant 0 : index
    %c0_5 = arith.constant 0 : index
    %5 = vector.load %arg4[%c0_4, %c0_5] : memref<64x128xbf16, #tpu.memory_space<vmem>>, vector<64x128xbf16>
    %cst = arith.constant dense<0.000000e+00> : vector<128x128xf32>
    %6 = tpu.matmul %4, %5, %cst {dimension_numbers = #tpu.dot_dimension_numbers<[1], [0], [0], [1], [0, 0, 1, 1], [], []>} : vector<128x64xbf16>, vector<64x128xbf16>, vector<128x128xf32> -> vector<128x128xf32>
    %7 = arith.addf %3, %6 : vector<128x128xf32>
    %c0_6 = arith.constant 0 : index
    %c0_7 = arith.constant 0 : index
    %8 = vector.load %arg7[%c0_6, %c0_7] : memref<128x128xf32, #tpu.memory_space<vmem>>, vector<128x128xf32>
    tpu.vector_store %arg7[%c0_6, %c0_7], %7 {strides = array<i32>} : memref<128x128xf32, #tpu.memory_space<vmem>>, vector<128x128xf32>,
    %c0_i32_8 = arith.constant 0 : i32
    %9 = arith.cmpi eq, %arg2, %c0_i32_8 : i32
    %10 = arith.extui %9 : i1 to i32
    %c0_i32_9 = arith.constant 0 : i32
    %11 = arith.cmpi ne, %10, %c0_i32_9 : i32
    scf.if %11 {
      %c0_10 = arith.constant 0 : index
      %c0_11 = arith.constant 0 : index
      %12 = vector.load %arg7[%c0_10, %c0_11] : memref<128x128xf32, #tpu.memory_space<vmem>>, vector<128x128xf32>
      %c0_12 = arith.constant 0 : index
      %c0_13 = arith.constant 0 : index
      %13 = vector.load %arg5[%c0_12, %c0_13] : memref<1x128xf32, #tpu.memory_space<vmem>>, vector<1x128xf32>
      %14 = vector.broadcast %13 : vector<1x128xf32> to vector<128x128xf32>
      %15 = arith.addf %12, %14 : vector<128x128xf32>
      %cst_14 = arith.constant 2.000000e-01 : f32
      %16 = vector.broadcast %cst_14 : f32 to vector<128x128xf32>
      %17 = arith.mulf %16, %15 : vector<128x128xf32>
      %18 = arith.maximumf %15, %17 : vector<128x128xf32>
      %19 = arith.truncf %18 : vector<128x128xf32> to vector<128x128xbf16>
      %c0_15 = arith.constant 0 : index
      %c0_16 = arith.constant 0 : index
      %20 = vector.load %arg6[%c0_15, %c0_16] : memref<128x128xbf16, #tpu.memory_space<vmem>>, vector<128x128xbf16>
      tpu.vector_store %arg6[%c0_15, %c0_16], %19 {strides = array<i32>} : memref<128x128xbf16, #tpu.memory_space<vmem>>, vector<128x128xbf16>,
    } else {
    }
    return
  }
  func.func @transform_0(%arg0: i32, %arg1: i32, %arg2: i32) -> (i32, i32) {
    %c0_i32 = arith.constant 0 : i32
    return %arg0, %arg2 : i32, i32
  }
  func.func @transform_1(%arg0: i32, %arg1: i32, %arg2: i32) -> (i32, i32) {
    %c0_i32 = arith.constant 0 : i32
    return %arg2, %arg1 : i32, i32
  }
  func.func @transform_2(%arg0: i32, %arg1: i32, %arg2: i32) -> (i32, i32) {
    %c0_i32 = arith.constant 0 : i32
    %c0_i32_0 = arith.constant 0 : i32
    return %c0_i32, %arg1 : i32, i32
  }
  func.func @transform_3(%arg0: i32, %arg1: i32, %arg2: i32) -> (i32, i32) {
    %c0_i32 = arith.constant 0 : i32
    return %arg0, %arg1 : i32, i32
  }
}

</mosaic_0001>

<llo_original>
// kernel: tpu_custom_call.1
$region0: #{tpu_custom_call.1}
  #allocation0 [shape = 'u32[]', space=smem, size = 0x4, offset = 0x4, fixed_abs, tag = 'smem constant byte address 0x4 - core index']
  #allocation1 [shape = 'u32[144,128]{1,0:T(1,128)}', space=vmem, size = 0x12000, scoped, tag = 'internal scratch']
  #allocation2 [shape = 'f32[128,128]{1,0:T(8,128)}', space=vmem, size = 0x10000, scoped, tag = 'scratch operand']
  %s0 = inlined_call_operand.vmem [shape: bf16[128,64], index: 0, kind: input, shape index: {}]
  %s1 = inlined_call_operand.vmem [shape: bf16[64,128], index: 1, kind: input, shape index: {}]
  %s2 = inlined_call_operand.vmem [shape: f32[1,128], index: 2, kind: input, shape index: {}]
  %s3 = inlined_call_operand.hbm [shape: bf16[128,128], index: 3, kind: output, shape index: {}]
  %s4 = sld [smem:[#allocation0]]
  $region30: #{tpu_custom_call.1} parent=0
    _
  %s6 = ssub.s32 1, %s4
  %s7 = scalar_select 0, %s6, %s4
  $region1: #{tpu_custom_call.1} parent=0
    #allocation3 [shape = 'u8[32768]{0}', space=vmem, size = 0x8000, scoped, tag = 'output window, operand 0, single buffered']
    #allocation4 [shape = 's32[1]{0}', space=sflag, size = 0x4, scoped, tag = 'scoped memory for tpu_custom_call.1']
    %8 = vsyncpa [#allocation4], 0
    // Predicated region
    $region2: #{tpu_custom_call.1} parent=1 // pred_check
      _
    $region3: #{tpu_custom_call.1} parent=1 // pred_check_branch
      %10 = sbr.rel (0) target = $region5
    $region4: #{tpu_custom_call.1} parent=1 // pred_region
      _
    $region5: #{tpu_custom_call.1} parent=1 // pred_fallthru
      _
    // Predicated region
    $region6: #{tpu_custom_call.1} parent=1 // pred_check
      _
    $region7: #{tpu_custom_call.1} parent=1 // pred_check_branch
      %12 = sbr.rel (0) target = $region9
    $region8: #{tpu_custom_call.1} parent=1 // pred_region
      _
    $region9: #{tpu_custom_call.1} parent=1 // pred_fallthru
      _
    // Predicated region
    $region10: #{tpu_custom_call.1} parent=1 // pred_check
      _
    $region11: #{tpu_custom_call.1} parent=1 // pred_check_branch
      %14 = sbr.rel (0) target = $region13
    $region12: #{tpu_custom_call.1} parent=1 // pred_region
      _
    $region13: #{tpu_custom_call.1} parent=1 // pred_fallthru
      _
    %p16 = scmp.eq.s32.totalorder 0, 0
    // Predicated region
    $region14: #{tpu_custom_call.1} parent=1 // pred_check
      %p17 = pneg %p16
    $region15: #{tpu_custom_call.1} parent=1 // pred_check_branch
      %19 = sbr.rel (%p17) target = $region17
    $region16: #{tpu_custom_call.1} parent=1 // pred_region
      %20 = vst [vmem:[#allocation2] sm:$0xff] 0.0
      %21 = vst [vmem:[#allocation2 + $0x8] sm:$0xff] 0.0
      %22 = vst [vmem:[#allocation2 + $0x10] sm:$0xff] 0.0
      %23 = vst [vmem:[#allocation2 + $0x18] sm:$0xff] 0.0
      %24 = vst [vmem:[#allocation2 + $0x20] sm:$0xff] 0.0
      %25 = vst [vmem:[#allocation2 + $0x28] sm:$0xff] 0.0
      %26 = vst [vmem:[#allocation2 + $0x30] sm:$0xff] 0.0
      %27 = vst [vmem:[#allocation2 + $0x38] sm:$0xff] 0.0
      %28 = vst [vmem:[#allocation2 + $0x40] sm:$0xff] 0.0
      %29 = vst [vmem:[#allocation2 + $0x48] sm:$0xff] 0.0
      %30 = vst [vmem:[#allocation2 + $0x50] sm:$0xff] 0.0
      %31 = vst [vmem:[#allocation2 + $0x58] sm:$0xff] 0.0
      %32 = vst [vmem:[#allocation2 + $0x60] sm:$0xff] 0.0
      %33 = vst [vmem:[#allocation2 + $0x68] sm:$0xff] 0.0
      %34 = vst [vmem:[#allocation2 + $0x70] sm:$0xff] 0.0
      %35 = vst [vmem:[#allocation2 + $0x78] sm:$0xff] 0.0
    $region17: #{tpu_custom_call.1} parent=1 // pred_fallthru
      _
    %v36 = vld [vmem:[#allocation2] sm:$0xff]
    %v37 = vld [vmem:[#allocation2 + $0x8] sm:$0xff]
    %v38 = vld [vmem:[#allocation2 + $0x10] sm:$0xff]
    %v39 = vld [vmem:[#allocation2 + $0x18] sm:$0xff]
    %v40 = vld [vmem:[#allocation2 + $0x20] sm:$0xff]
    %v41 = vld [vmem:[#allocation2 + $0x28] sm:$0xff]
    %v42 = vld [vmem:[#allocation2 + $0x30] sm:$0xff]
    %v43 = vld [vmem:[#allocation2 + $0x38] sm:$0xff]
    %v44 = vld [vmem:[#allocation2 + $0x40] sm:$0xff]
    %v45 = vld [vmem:[#allocation2 + $0x48] sm:$0xff]
    %v46 = vld [vmem:[#allocation2 + $0x50] sm:$0xff]
    %v47 = vld [vmem:[#allocation2 + $0x58] sm:$0xff]
    %v48 = vld [vmem:[#allocation2 + $0x60] sm:$0xff]
    %v49 = vld [vmem:[#allocation2 + $0x68] sm:$0xff]
    %v50 = vld [vmem:[#allocation2 + $0x70] sm:$0xff]
    %v51 = vld [vmem:[#allocation2 + $0x78] sm:$0xff]
    %v52 = vld [vmem:[%s0] sm:$0xf]
    %v53 = vld [vmem:[%s0 + $0x4] sm:$0xf]
    %v54 = vld [vmem:[%s0 + $0x8] sm:$0xf]
    %v55 = vld [vmem:[%s0 + $0xc] sm:$0xf]
    %v56 = vld [vmem:[%s0 + $0x10] sm:$0xf]
    %v57 = vld [vmem:[%s0 + $0x14] sm:$0xf]
    %v58 = vld [vmem:[%s0 + $0x18] sm:$0xf]
    %v59 = vld [vmem:[%s0 + $0x1c] sm:$0xf]
    %v60 = vld [vmem:[%s0 + $0x20] sm:$0xf]
    %v61 = vld [vmem:[%s0 + $0x24] sm:$0xf]
    %v62 = vld [vmem:[%s0 + $0x28] sm:$0xf]
    %v63 = vld [vmem:[%s0 + $0x2c] sm:$0xf]
    %v64 = vld [vmem:[%s0 + $0x30] sm:$0xf]
    %v65 = vld [vmem:[%s0 + $0x34] sm:$0xf]
    %v66 = vld [vmem:[%s0 + $0x38] sm:$0xf]
    %v67 = vld [vmem:[%s0 + $0x3c] sm:$0xf]
    %v68 = vld [vmem:[%s1] sm:$0xf]
    %v69 = vld [vmem:[%s1 + $0x4] sm:$0xf]
    %v70 = vld [vmem:[%s1 + $0x8] sm:$0xf]
    %v71 = vld [vmem:[%s1 + $0xc] sm:$0xf]
    %v72 = vld [vmem:[%s1 + $0x10] sm:$0xf]
    %v73 = vld [vmem:[%s1 + $0x14] sm:$0xf]
    %v74 = vld [vmem:[%s1 + $0x18] sm:$0xf]
    %v75 = vld [vmem:[%s1 + $0x1c] sm:$0xf]
    %v92 = vunpack.c.l.b16 %v52
    %v93 = vunpack.c.l.b16 %v53
    %v94 = vunpack.c.l.b16 %v54
    %v95 = vunpack.c.l.b16 %v55
    %v96 = vunpack.c.l.b16 %v56
    %v97 = vunpack.c.l.b16 %v57
    %v98 = vunpack.c.l.b16 %v58
    %v99 = vunpack.c.l.b16 %v59
    %v100 = vunpack.c.l.b16 %v60
    %v101 = vunpack.c.l.b16 %v61
    %v102 = vunpack.c.l.b16 %v62
    %v103 = vunpack.c.l.b16 %v63
    %v104 = vunpack.c.l.b16 %v64
    %v105 = vunpack.c.l.b16 %v65
    %v106 = vunpack.c.l.b16 %v66
    %v107 = vunpack.c.l.b16 %v67
    %v108 = vpack.c.b16 %v93, %v92
    %v109 = vpack.c.b16 %v95, %v94
    %v110 = vpack.c.b16 %v97, %v96
    %v111 = vpack.c.b16 %v99, %v98
    %v112 = vpack.c.b16 %v101, %v100
    %v113 = vpack.c.b16 %v103, %v102
    %v114 = vpack.c.b16 %v105, %v104
    %v115 = vpack.c.b16 %v107, %v106
    %v124 = vunpack.c.l.b16 %v68
    %v125 = vunpack.c.l.b16 %v69
    %v126 = vunpack.c.l.b16 %v70
    %v127 = vunpack.c.l.b16 %v71
    %v128 = vunpack.c.l.b16 %v72
    %v129 = vunpack.c.l.b16 %v73
    %v130 = vunpack.c.l.b16 %v74
    %v131 = vunpack.c.l.b16 %v75
    %v132 = vpack.c.b16 %v125, %v124
    %v133 = vpack.c.b16 %v127, %v126
    %v134 = vpack.c.b16 %v129, %v128
    %v135 = vpack.c.b16 %v131, %v130
    %vm140 = vcmask 523264
    %v142 = vsel %vm140, %v108, 0
    %v145 = vsel %vm140, %v109, 0
    %v148 = vsel %vm140, %v110, 0
    %v151 = vsel %vm140, %v111, 0
    %v154 = vsel %vm140, %v112, 0
    %v157 = vsel %vm140, %v113, 0
    %v160 = vsel %vm140, %v114, 0
    %v163 = vsel %vm140, %v115, 0
    %165 = vmatprep.subr.bf16.mxu0 0
    %166 = vmatpush1.bf16.msra.mxu0 0
    %167 = vmatprep.subr.bf16.mxu0 0
    %168 = vmatpush1.bf16.msra.mxu0 0
    %169 = vmatprep.subr.bf16.mxu0 0
    %170 = vmatpush1.bf16.msra.mxu0 0
    %171 = vmatprep.subr.bf16.mxu0 0
    %172 = vmatpush1.bf16.msra.mxu0 0
    %173 = vmatprep.subr.bf16.mxu0 0
    %174 = vmatpush1.bf16.msra.mxu0 %v135
    %175 = vmatprep.subr.bf16.mxu0 0
    %176 = vmatpush1.bf16.msra.mxu0 %v134
    %177 = vmatprep.subr.bf16.mxu0 0
    %178 = vmatpush1.bf16.msra.mxu0 %v133
    %179 = vmatprep.subr.bf16.mxu0 0
    %180 = vmatpush1.bf16.msra.mxu0 %v132
    %181 = vmatprep.subr.bf16.mxu0 0
    %182 = vmatpush2.bf16.msra.mxu0 0
    %183 = vmatprep.subr.bf16.mxu0 0
    %184 = vmatpush2.bf16.msra.mxu0 0
    %185 = vmatprep.subr.bf16.mxu0 0
    %186 = vmatpush2.bf16.msra.mxu0 0
    %187 = vmatprep.subr.bf16.mxu0 0
    %188 = vmatpush2.bf16.msra.mxu0 0
    %189 = vmatprep.subr.bf16.mxu0 0
    %190 = vmatpush2.bf16.msra.mxu0 0
    %191 = vmatprep.subr.bf16.mxu0 0
    %192 = vmatpush2.bf16.msra.mxu0 0
    %193 = vmatprep.subr.bf16.mxu0 0
    %194 = vmatpush2.bf16.msra.mxu0 0
    %195 = vmatprep.subr.bf16.mxu0 0
    %196 = vmatpush2.bf16.msra.mxu0 0
    %197 = vmatprep.mubr.bf16.mxu0 0
    %198 = vmatmul.mubr.bf16.gmra.mxu0 %v142
    %v199 = vpop.f32.mrf.mxu0
    %v200 = vadd.f32 0.0, %v199
    %v201 = vpop.f32.mrf.mxu0
    %v202 = vpop.f32.mrf.mxu0
    %v203 = vadd.f32 0.0, %v202
    %v204 = vpop.f32.mrf.mxu0
    %205 = vmatprep.mubr.bf16.mxu0 0
    %206 = vmatmul.mubr.bf16.gmra.mxu0 %v145
    %v207 = vpop.f32.mrf.mxu0
    %v208 = vadd.f32 0.0, %v207
    %v209 = vpop.f32.mrf.mxu0
    %v210 = vpop.f32.mrf.mxu0
    %v211 = vadd.f32 0.0, %v210
    %v212 = vpop.f32.mrf.mxu0
    %213 = vmatprep.mubr.bf16.mxu0 0
    %214 = vmatmul.mubr.bf16.gmra.mxu0 %v148
    %v215 = vpop.f32.mrf.mxu0
    %v216 = vadd.f32 0.0, %v215
    %v217 = vpop.f32.mrf.mxu0
    %v218 = vpop.f32.mrf.mxu0
    %v219 = vadd.f32 0.0, %v218
    %v220 = vpop.f32.mrf.mxu0
    %221 = vmatprep.mubr.bf16.mxu0 0
    %222 = vmatmul.mubr.bf16.gmra.mxu0 %v151
    %v223 = vpop.f32.mrf.mxu0
    %v224 = vadd.f32 0.0, %v223
    %v225 = vpop.f32.mrf.mxu0
    %v226 = vpop.f32.mrf.mxu0
    %v227 = vadd.f32 0.0, %v226
    %v228 = vpop.f32.mrf.mxu0
    %229 = vmatprep.mubr.bf16.mxu0 0
    %230 = vmatmul.mubr.bf16.gmra.mxu0 %v154
    %v231 = vpop.f32.mrf.mxu0
    %v232 = vadd.f32 0.0, %v231
    %v233 = vpop.f32.mrf.mxu0
    %v234 = vpop.f32.mrf.mxu0
    %v235 = vadd.f32 0.0, %v234
    %v236 = vpop.f32.mrf.mxu0
    %237 = vmatprep.mubr.bf16.mxu0 0
    %238 = vmatmul.mubr.bf16.gmra.mxu0 %v157
    %v239 = vpop.f32.mrf.mxu0
    %v240 = vadd.f32 0.0, %v239
    %v241 = vpop.f32.mrf.mxu0
    %v242 = vpop.f32.mrf.mxu0
    %v243 = vadd.f32 0.0, %v242
    %v244 = vpop.f32.mrf.mxu0
    %245 = vmatprep.mubr.bf16.mxu0 0
    %246 = vmatmul.mubr.bf16.gmra.mxu0 %v160
    %v247 = vpop.f32.mrf.mxu0
    %v248 = vadd.f32 0.0, %v247
    %v249 = vpop.f32.mrf.mxu0
    %v250 = vpop.f32.mrf.mxu0
    %v251 = vadd.f32 0.0, %v250
    %v252 = vpop.f32.mrf.mxu0
    %253 = vmatprep.mubr.bf16.mxu0 0
    %254 = vmatmul.mubr.bf16.gmra.mxu0 %v163
    %v255 = vpop.f32.mrf.mxu0
    %v256 = vadd.f32 0.0, %v255
    %v257 = vpop.f32.mrf.mxu0
    %v258 = vpop.f32.mrf.mxu0
    %v259 = vadd.f32 0.0, %v258
    %v260 = vpop.f32.mrf.mxu0
    %261 = vdwg.mxu0
    %v262 = vadd.f32 %v36, %v200
    %v263 = vadd.f32 %v37, %v203
    %v264 = vadd.f32 %v38, %v208
    %v265 = vadd.f32 %v39, %v211
    %v266 = vadd.f32 %v40, %v216
    %v267 = vadd.f32 %v41, %v219
    %v268 = vadd.f32 %v42, %v224
    %v269 = vadd.f32 %v43, %v227
    %v270 = vadd.f32 %v44, %v232
    %v271 = vadd.f32 %v45, %v235
    %v272 = vadd.f32 %v46, %v240
    %v273 = vadd.f32 %v47, %v243
    %v274 = vadd.f32 %v48, %v248
    %v275 = vadd.f32 %v49, %v251
    %v276 = vadd.f32 %v50, %v256
    %v277 = vadd.f32 %v51, %v259
    %278 = vst [vmem:[#allocation2] sm:$0xff] %v262
    %279 = vst [vmem:[#allocation2 + $0x8] sm:$0xff] %v263
    %280 = vst [vmem:[#allocation2 + $0x10] sm:$0xff] %v264
    %281 = vst [vmem:[#allocation2 + $0x18] sm:$0xff] %v265
    %282 = vst [vmem:[#allocation2 + $0x20] sm:$0xff] %v266
    %283 = vst [vmem:[#allocation2 + $0x28] sm:$0xff] %v267
    %284 = vst [vmem:[#allocation2 + $0x30] sm:$0xff] %v268
    %285 = vst [vmem:[#allocation2 + $0x38] sm:$0xff] %v269
    %286 = vst [vmem:[#allocation2 + $0x40] sm:$0xff] %v270
    %287 = vst [vmem:[#allocation2 + $0x48] sm:$0xff] %v271
    %288 = vst [vmem:[#allocation2 + $0x50] sm:$0xff] %v272
    %289 = vst [vmem:[#allocation2 + $0x58] sm:$0xff] %v273
    %290 = vst [vmem:[#allocation2 + $0x60] sm:$0xff] %v274
    %291 = vst [vmem:[#allocation2 + $0x68] sm:$0xff] %v275
    %292 = vst [vmem:[#allocation2 + $0x70] sm:$0xff] %v276
    %293 = vst [vmem:[#allocation2 + $0x78] sm:$0xff] %v277
    // Predicated region
    $region18: #{tpu_custom_call.1} parent=1 // pred_check
      %p294 = pneg %p16
    $region19: #{tpu_custom_call.1} parent=1 // pred_check_branch
      %296 = sbr.rel (%p294) target = $region21
    $region20: #{tpu_custom_call.1} parent=1 // pred_region
      %v297 = vld [vmem:[#allocation2] sm:$0xff]
      %v298 = vld [vmem:[#allocation2 + $0x8] sm:$0xff]
      %v299 = vld [vmem:[#allocation2 + $0x10] sm:$0xff]
      %v300 = vld [vmem:[#allocation2 + $0x18] sm:$0xff]
      %v301 = vld [vmem:[#allocation2 + $0x20] sm:$0xff]
      %v302 = vld [vmem:[#allocation2 + $0x28] sm:$0xff]
      %v303 = vld [vmem:[#allocation2 + $0x30] sm:$0xff]
      %v304 = vld [vmem:[#allocation2 + $0x38] sm:$0xff]
      %v305 = vld [vmem:[#allocation2 + $0x40] sm:$0xff]
      %v306 = vld [vmem:[#allocation2 + $0x48] sm:$0xff]
      %v307 = vld [vmem:[#allocation2 + $0x50] sm:$0xff]
      %v308 = vld [vmem:[#allocation2 + $0x58] sm:$0xff]
      %v309 = vld [vmem:[#allocation2 + $0x60] sm:$0xff]
      %v310 = vld [vmem:[#allocation2 + $0x68] sm:$0xff]
      %v311 = vld [vmem:[#allocation2 + $0x70] sm:$0xff]
      %v312 = vld [vmem:[#allocation2 + $0x78] sm:$0xff]
      %v313 = vld [vmem:[%s2] sm:$0x1]
      %v315 = vlaneseq
      %v316 = vshrl.u32 %v315, 7
      %v317 = vsub.s32 0, %v316
      %v318 = vrot.slane %v313, %v317
      %v320 = vadd.f32 %v297, %v318
      %v321 = vadd.f32 %v298, %v318
      %v322 = vadd.f32 %v299, %v318
      %v323 = vadd.f32 %v300, %v318
      %v324 = vadd.f32 %v301, %v318
      %v325 = vadd.f32 %v302, %v318
      %v326 = vadd.f32 %v303, %v318
      %v327 = vadd.f32 %v304, %v318
      %v328 = vadd.f32 %v305, %v318
      %v329 = vadd.f32 %v306, %v318
      %v330 = vadd.f32 %v307, %v318
      %v331 = vadd.f32 %v308, %v318
      %v332 = vadd.f32 %v309, %v318
      %v333 = vadd.f32 %v310, %v318
      %v334 = vadd.f32 %v311, %v318
      %v335 = vadd.f32 %v312, %v318
      %v336 = vmul.f32 %v320, 0.2
      %v337 = vmul.f32 %v321, 0.2
      %v338 = vmul.f32 %v322, 0.2
      %v339 = vmul.f32 %v323, 0.2
      %v340 = vmul.f32 %v324, 0.2
      %v341 = vmul.f32 %v325, 0.2
      %v342 = vmul.f32 %v326, 0.2
      %v343 = vmul.f32 %v327, 0.2
      %v344 = vmul.f32 %v328, 0.2
      %v345 = vmul.f32 %v329, 0.2
      %v346 = vmul.f32 %v330, 0.2
      %v347 = vmul.f32 %v331, 0.2
      %v348 = vmul.f32 %v332, 0.2
      %v349 = vmul.f32 %v333, 0.2
      %v350 = vmul.f32 %v334, 0.2
      %v351 = vmul.f32 %v335, 0.2
      %v352 = vmax.f32 %v320, %v336
      %v353 = vmax.f32 %v321, %v337
      %v354 = vmax.f32 %v322, %v338
      %v355 = vmax.f32 %v323, %v339
      %v356 = vmax.f32 %v324, %v340
      %v357 = vmax.f32 %v325, %v341
      %v358 = vmax.f32 %v326, %v342
      %v359 = vmax.f32 %v327, %v343
      %v360 = vmax.f32 %v328, %v344
      %v361 = vmax.f32 %v329, %v345
      %v362 = vmax.f32 %v330, %v346
      %v363 = vmax.f32 %v331, %v347
      %v364 = vmax.f32 %v332, %v348
      %v365 = vmax.f32 %v333, %v349
      %v366 = vmax.f32 %v334, %v350
      %v367 = vmax.f32 %v335, %v351
      %v368 = vpack.c.bf16 %v353, %v352
      %v369 = vpack.c.bf16 %v355, %v354
      %v370 = vpack.c.bf16 %v357, %v356
      %v371 = vpack.c.bf16 %v359, %v358
      %v372 = vpack.c.bf16 %v361, %v360
      %v373 = vpack.c.bf16 %v363, %v362
      %v374 = vpack.c.bf16 %v365, %v364
      %v375 = vpack.c.bf16 %v367, %v366
      %v384 = vunpack.c.l.b16 %v368
      %v385 = vunpack.c.h.b16 %v368
      %v386 = vunpack.c.l.b16 %v369
      %v387 = vunpack.c.h.b16 %v369
      %v388 = vunpack.c.l.b16 %v370
      %v389 = vunpack.c.h.b16 %v370
      %v390 = vunpack.c.l.b16 %v371
      %v391 = vunpack.c.h.b16 %v371
      %v392 = vunpack.c.l.b16 %v372
      %v393 = vunpack.c.h.b16 %v372
      %v394 = vunpack.c.l.b16 %v373
      %v395 = vunpack.c.h.b16 %v373
      %v396 = vunpack.c.l.b16 %v374
      %v397 = vunpack.c.h.b16 %v374
      %v398 = vunpack.c.l.b16 %v375
      %v399 = vunpack.c.h.b16 %v375
      %v400 = vpack.c.b16 %v384, %v384
      %v401 = vpack.c.b16 %v385, %v385
      %v402 = vpack.c.b16 %v386, %v386
      %v403 = vpack.c.b16 %v387, %v387
      %v404 = vpack.c.b16 %v388, %v388
      %v405 = vpack.c.b16 %v389, %v389
      %v406 = vpack.c.b16 %v390, %v390
      %v407 = vpack.c.b16 %v391, %v391
      %v408 = vpack.c.b16 %v392, %v392
      %v409 = vpack.c.b16 %v393, %v393
      %v410 = vpack.c.b16 %v394, %v394
      %v411 = vpack.c.b16 %v395, %v395
      %v412 = vpack.c.b16 %v396, %v396
      %v413 = vpack.c.b16 %v397, %v397
      %v414 = vpack.c.b16 %v398, %v398
      %v415 = vpack.c.b16 %v399, %v399
      %432 = vst [vmem:[#allocation3] sm:$0xf] %v400
      %433 = vst [vmem:[#allocation3 + $0x4] sm:$0xf] %v401
      %434 = vst [vmem:[#allocation3 + $0x8] sm:$0xf] %v402
      %435 = vst [vmem:[#allocation3 + $0xc] sm:$0xf] %v403
      %436 = vst [vmem:[#allocation3 + $0x10] sm:$0xf] %v404
      %437 = vst [vmem:[#allocation3 + $0x14] sm:$0xf] %v405
      %438 = vst [vmem:[#allocation3 + $0x18] sm:$0xf] %v406
      %439 = vst [vmem:[#allocation3 + $0x1c] sm:$0xf] %v407
      %440 = vst [vmem:[#allocation3 + $0x20] sm:$0xf] %v408
      %441 = vst [vmem:[#allocation3 + $0x24] sm:$0xf] %v409
      %442 = vst [vmem:[#allocation3 + $0x28] sm:$0xf] %v410
      %443 = vst [vmem:[#allocation3 + $0x2c] sm:$0xf] %v411
      %444 = vst [vmem:[#allocation3 + $0x30] sm:$0xf] %v412
      %445 = vst [vmem:[#allocation3 + $0x34] sm:$0xf] %v413
      %446 = vst [vmem:[#allocation3 + $0x38] sm:$0xf] %v414
      %447 = vst [vmem:[#allocation3 + $0x3c] sm:$0xf] %v415
    $region21: #{tpu_custom_call.1} parent=1 // pred_fallthru
      _
    // Predicated region
    $region22: #{tpu_custom_call.1} parent=1 // pred_check
      _
    $region23: #{tpu_custom_call.1} parent=1 // pred_check_branch
      %449 = sbr.rel (0) target = $region25
    $region24: #{tpu_custom_call.1} parent=1 // pred_region
      %s451 = ssub.s32 1024, 1024
      %452 = vsyncadd [#allocation4], %s451
      %s453 = sshll.u32 [#allocation3], 4
      %s454 = int_to_ptr.vmem [resolvable:$true] %s453
      %459 = dma.vmem_to_hbm [thread:$0]  %s454, 1024, %s3, [#allocation4], 64, 64, 4
    $region25: #{tpu_custom_call.1} parent=1 // pred_fallthru
      _
    // Predicated region
    $region26: #{tpu_custom_call.1} parent=1 // pred_check
      _
    $region27: #{tpu_custom_call.1} parent=1 // pred_check_branch
      %461 = sbr.rel (0) target = $region29
    $region28: #{tpu_custom_call.1} parent=1 // pred_region
      %462 = dma.done [#allocation4], 1024
    $region29: #{tpu_custom_call.1} parent=1 // pred_fallthru
      _
    %463 = vsyncpa [#allocation4], 1

</llo_original>
